<compile_context>
chip_gen: v7x
topology: tpu7x:2x2x1
jax: 0.10.0
libtpu: 0.0.40
codegen_flags: <defaults>
</compile_context>

<pallas_src>
import jax
import jax.numpy as jnp
from jax.experimental import pallas as pl
from jax.experimental.pallas import tpu as pltpu

_VMEM_LIMIT = 32 * 1024 * 1024  # within physical VMEM on v5e/v6e/v7x


def _pick_hw_tile(hw, requested=None):
    """Largest lane-dense tile (multiple of 128, prefer >=512) dividing HW."""
    if requested is not None:
        assert hw % requested == 0, "hw_tile must divide H*W"
        return requested
    for t in (2048, 1024, 512, 256, 128):
        if hw % t == 0:
            return t
    return hw  # tiny / non-128-divisible spatial: single full-width tile


def sse_block(x_nchw, gamma, beta, w, b, *, hw_tile=None, eps=1e-5):
    """x_nchw: (N, C, H, W).  gamma/beta: (C,).  w: (C_out, C_in, 1, 1).  b: (C_out,)."""
    N, C, H, W = x_nchw.shape
    C_out, C_in = w.shape[0], w.shape[1]
    # Final broadcast multiply (bn * sigmoid(conv(pool))) requires C_out == C_in.
    assert C_in == C and C_out == C, "SSEBlock broadcast requires out_channels == in_channels"

    HW = H * W
    THW = _pick_hw_tile(HW, hw_tile)
    num_tiles = HW // THW

    x = x_nchw.reshape(N, C, HW)
    # Wrapper-side layout plumbing (free in XLA) so the kernels do no relayouts.
    gamma2 = gamma.reshape(1, C).astype(jnp.float32)
    beta2 = beta.reshape(1, C).astype(jnp.float32)
    wt = w.reshape(C_out, C_in).T.astype(jnp.float32)   # (C_in, C_out), pre-transposed
    bias2 = b.reshape(1, C_out).astype(jnp.float32)

    # ---------------- Pass 1: sum / sumsq reduction + A,B finalize ----------------
    def stats_kernel(x_ref, g_ref, bt_ref, wt_ref, bias_ref,
                     a_ref, b_ref, sum_acc, sumsq_acc):
        h = pl.program_id(0)

        @pl.when(h == 0)
        def _init():
            sum_acc[...] = jnp.zeros_like(sum_acc)
            sumsq_acc[...] = jnp.zeros_like(sumsq_acc)

        xt = x_ref[...].astype(jnp.float32)            # (N, C, THW), f32 accumulation
        sum_acc[...] += jnp.sum(xt, axis=2)            # (N, C)
        sumsq_acc[...] += jnp.sum(xt * xt, axis=2)     # (N, C)

        @pl.when(h == pl.num_programs(0) - 1)
        def _finalize():
            inv_cnt = 1.0 / float(N * HW)
            s_nc = sum_acc[...]                                            # (N, C)
            q_nc = sumsq_acc[...]                                          # (N, C)
            mean_c = jnp.sum(s_nc, axis=0, keepdims=True) * inv_cnt        # (1, C)
            ex2_c = jnp.sum(q_nc, axis=0, keepdims=True) * inv_cnt         # (1, C)
            var_c = jnp.maximum(ex2_c - mean_c * mean_c, 0.0)              # biased var
            rstd = jax.lax.rsqrt(var_c + eps)                              # (1, C)
            scale = g_ref[...] * rstd                                      # gamma*rstd
            shift = bt_ref[...] - mean_c * scale                           # beta - mean*gamma*rstd
            # pooled bn value per (n,c): mean_HW(bn) = mean_HW(x)*scale + shift
            pooled = s_nc * (1.0 / float(HW)) * scale + shift              # (N, C)
            y = jnp.dot(pooled, wt_ref[...],
                        preferred_element_type=jnp.float32) + bias_ref[...]
            gate = jax.nn.sigmoid(y)                                       # (N, C)
            a_ref[...] = scale * gate                                      # A[n,c]
            b_ref[...] = shift * gate                                      # B[n,c]

    A, B = pl.pallas_call(
        stats_kernel,
        out_shape=(jax.ShapeDtypeStruct((N, C), jnp.float32),
                   jax.ShapeDtypeStruct((N, C), jnp.float32)),
        grid=(num_tiles,),
        in_specs=[
            pl.BlockSpec((N, C, THW), lambda h: (0, 0, h)),
            pl.BlockSpec((1, C), lambda h: (0, 0)),
            pl.BlockSpec((1, C), lambda h: (0, 0)),
            pl.BlockSpec((C, C), lambda h: (0, 0)),
            pl.BlockSpec((1, C), lambda h: (0, 0)),
        ],
        out_specs=(pl.BlockSpec((N, C), lambda h: (0, 0)),
                   pl.BlockSpec((N, C), lambda h: (0, 0))),
        scratch_shapes=[pltpu.VMEM((N, C), jnp.float32),
                        pltpu.VMEM((N, C), jnp.float32)],
        compiler_params=pltpu.CompilerParams(
            dimension_semantics=("arbitrary",),
            vmem_limit_bytes=_VMEM_LIMIT),
    )(x, gamma2, beta2, wt, bias2)

    # ---------------- Pass 2: writeback out = x*A + B over lane-dense HW tiles ----
    A3 = A.reshape(N, C, 1)   # free wrapper reshape so the kernel just broadcasts lanes
    B3 = B.reshape(N, C, 1)

    def writeback_kernel(x_ref, a_ref, b_ref, o_ref):
        o_ref[...] = (x_ref[...] * a_ref[...] + b_ref[...]).astype(o_ref.dtype)

    out = pl.pallas_call(
        writeback_kernel,
        out_shape=jax.ShapeDtypeStruct((N, C, HW), x_nchw.dtype),
        grid=(num_tiles,),
        in_specs=[
            pl.BlockSpec((N, C, THW), lambda h: (0, 0, h)),
            pl.BlockSpec((N, C, 1), lambda h: (0, 0, 0)),
            pl.BlockSpec((N, C, 1), lambda h: (0, 0, 0)),
        ],
        out_specs=pl.BlockSpec((N, C, THW), lambda h: (0, 0, h)),
        compiler_params=pltpu.CompilerParams(
            dimension_semantics=("parallel",),   # independent tiles: v7x megacore shards
            vmem_limit_bytes=_VMEM_LIMIT),
    )(x, A3, B3)

    return out.reshape(N, C, H, W)


def sse_block_ref(x, gamma, beta, w, b):
    """Pure-JAX reference for validation."""
    mean = jnp.mean(x, axis=(0, 2, 3), keepdims=True)
    var = jnp.mean((x - mean) ** 2, axis=(0, 2, 3), keepdims=True)
    bn = (x - mean) / jnp.sqrt(var + 1e-5) * gamma[None, :, None, None] \
         + beta[None, :, None, None]
    pooled = jnp.mean(bn, axis=(2, 3))                         # (N, C)
    y = pooled @ w.reshape(w.shape[0], w.shape[1]).T + b[None, :]
    s = jax.nn.sigmoid(y)
    return bn * s[:, :, None, None]


if __name__ == "__main__":
    key = jax.random.PRNGKey(0)
    N, C, H, W = 2, 4, 16, 16
    k1, k2, k3, k4, k5 = jax.random.split(key, 5)
    x = jax.random.normal(k1, (N, C, H, W), dtype=jnp.float32)

    # Deterministic synthetic parameters (shapes per nn.BatchNorm2d / 1x1 nn.Conv2d).
    gamma = 1.0 + 0.1 * jax.random.normal(k2, (C,), dtype=jnp.float32)
    beta = 0.1 * jax.random.normal(k3, (C,), dtype=jnp.float32)
    w = 0.5 * jax.random.normal(k4, (C, C, 1, 1), dtype=jnp.float32)
    b = 0.1 * jax.random.normal(k5, (C,), dtype=jnp.float32)

    # hw_tile=128 -> 2 HW tiles, exercising the tiled accumulate + finalize path.
    out = sse_block(x, gamma, beta, w, b, hw_tile=128)
    jax.block_until_ready(out)

    ref = sse_block_ref(x, gamma, beta, w, b)
    assert out.shape == (N, C, H, W)
    assert jnp.allclose(out, ref, atol=1e-4, rtol=1e-4), "mismatch vs reference"

    print("KERNEL_OK")
</pallas_src>

<mosaic_0001>
module attributes {stable_mosaic.version = 11 : i64} {
  func.func @stats_kernel(%arg0: i32, %arg1: memref<2x4x128xf32, #tpu.memory_space<vmem>>, %arg2: memref<1x4xf32, #tpu.memory_space<vmem>>, %arg3: memref<1x4xf32, #tpu.memory_space<vmem>>, %arg4: memref<4x4xf32, #tpu.memory_space<vmem>>, %arg5: memref<1x4xf32, #tpu.memory_space<vmem>>, %arg6: memref<2x4xf32, #tpu.memory_space<vmem>>, %arg7: memref<2x4xf32, #tpu.memory_space<vmem>>, %arg8: memref<2x4xf32, #tpu.memory_space<vmem>>, %arg9: memref<2x4xf32, #tpu.memory_space<vmem>>) attributes {dimension_semantics = [#tpu.dimension_semantics<arbitrary>], iteration_bounds = array<i64: 2>, scalar_prefetch = 0 : i64, scratch_operands = 2 : i64, tpu.core_type = #tpu.core_type<tc>, window_params = [{transform_indices = @transform_0, window_bounds = array<i64: 2, 4, 128>}, {pipeline_mode = #tpu.pipeline_mode<synchronous>, transform_indices = @transform_1, window_bounds = array<i64: 1, 4>}, {pipeline_mode = #tpu.pipeline_mode<synchronous>, transform_indices = @transform_2, window_bounds = array<i64: 1, 4>}, {pipeline_mode = #tpu.pipeline_mode<synchronous>, transform_indices = @transform_3, window_bounds = array<i64: 4, 4>}, {pipeline_mode = #tpu.pipeline_mode<synchronous>, transform_indices = @transform_4, window_bounds = array<i64: 1, 4>}, {pipeline_mode = #tpu.pipeline_mode<synchronous>, transform_indices = @transform_5, window_bounds = array<i64: 2, 4>}, {pipeline_mode = #tpu.pipeline_mode<synchronous>, transform_indices = @transform_6, window_bounds = array<i64: 2, 4>}]} {
    %c0_i32 = arith.constant 0 : i32
    %0 = arith.cmpi eq, %arg0, %c0_i32 : i32
    %1 = arith.extui %0 : i1 to i32
    %c0_i32_0 = arith.constant 0 : i32
    %2 = arith.cmpi ne, %1, %c0_i32_0 : i32
    scf.if %2 {
      %cst_13 = arith.constant 0.000000e+00 : f32
      %16 = vector.broadcast %cst_13 : f32 to vector<2x4xf32>
      %c0_14 = arith.constant 0 : index
      %c0_15 = arith.constant 0 : index
      %17 = vector.load %arg8[%c0_14, %c0_15] : memref<2x4xf32, #tpu.memory_space<vmem>>, vector<2x4xf32>
      tpu.vector_store %arg8[%c0_14, %c0_15], %16 {strides = array<i32>} : memref<2x4xf32, #tpu.memory_space<vmem>>, vector<2x4xf32>,
      %cst_16 = arith.constant 0.000000e+00 : f32
      %18 = vector.broadcast %cst_16 : f32 to vector<2x4xf32>
      %c0_17 = arith.constant 0 : index
      %c0_18 = arith.constant 0 : index
      %19 = vector.load %arg9[%c0_17, %c0_18] : memref<2x4xf32, #tpu.memory_space<vmem>>, vector<2x4xf32>
      tpu.vector_store %arg9[%c0_17, %c0_18], %18 {strides = array<i32>} : memref<2x4xf32, #tpu.memory_space<vmem>>, vector<2x4xf32>,
    } else {
    }
    %c0 = arith.constant 0 : index
    %c0_1 = arith.constant 0 : index
    %c0_2 = arith.constant 0 : index
    %3 = vector.load %arg1[%c0, %c0_1, %c0_2] : memref<2x4x128xf32, #tpu.memory_space<vmem>>, vector<2x4x128xf32>
    %c0_3 = arith.constant 0 : index
    %c0_4 = arith.constant 0 : index
    %4 = vector.load %arg8[%c0_3, %c0_4] : memref<2x4xf32, #tpu.memory_space<vmem>>, vector<2x4xf32>
    %cst = arith.constant dense<0.000000e+00> : vector<2x4xf32>
    %5 = vector.multi_reduction <add>, %3, %cst [2] : vector<2x4x128xf32> to vector<2x4xf32>
    %6 = arith.addf %4, %5 : vector<2x4xf32>
    %c0_5 = arith.constant 0 : index
    %c0_6 = arith.constant 0 : index
    %7 = vector.load %arg8[%c0_5, %c0_6] : memref<2x4xf32, #tpu.memory_space<vmem>>, vector<2x4xf32>
    tpu.vector_store %arg8[%c0_5, %c0_6], %6 {strides = array<i32>} : memref<2x4xf32, #tpu.memory_space<vmem>>, vector<2x4xf32>,
    %c0_7 = arith.constant 0 : index
    %c0_8 = arith.constant 0 : index
    %8 = vector.load %arg9[%c0_7, %c0_8] : memref<2x4xf32, #tpu.memory_space<vmem>>, vector<2x4xf32>
    %9 = arith.mulf %3, %3 : vector<2x4x128xf32>
    %cst_9 = arith.constant dense<0.000000e+00> : vector<2x4xf32>
    %10 = vector.multi_reduction <add>, %9, %cst_9 [2] : vector<2x4x128xf32> to vector<2x4xf32>
    %11 = arith.addf %8, %10 : vector<2x4xf32>
    %c0_10 = arith.constant 0 : index
    %c0_11 = arith.constant 0 : index
    %12 = vector.load %arg9[%c0_10, %c0_11] : memref<2x4xf32, #tpu.memory_space<vmem>>, vector<2x4xf32>
    tpu.vector_store %arg9[%c0_10, %c0_11], %11 {strides = array<i32>} : memref<2x4xf32, #tpu.memory_space<vmem>>, vector<2x4xf32>,
    %c1_i32 = arith.constant 1 : i32
    %13 = arith.cmpi eq, %arg0, %c1_i32 : i32
    %14 = arith.extui %13 : i1 to i32
    %c0_i32_12 = arith.constant 0 : i32
    %15 = arith.cmpi ne, %14, %c0_i32_12 : i32
    scf.if %15 {
      %c0_13 = arith.constant 0 : index
      %c0_14 = arith.constant 0 : index
      %16 = vector.load %arg8[%c0_13, %c0_14] : memref<2x4xf32, #tpu.memory_space<vmem>>, vector<2x4xf32>
      %c0_15 = arith.constant 0 : index
      %c0_16 = arith.constant 0 : index
      %17 = vector.load %arg9[%c0_15, %c0_16] : memref<2x4xf32, #tpu.memory_space<vmem>>, vector<2x4xf32>
      %cst_17 = arith.constant dense<0.000000e+00> : vector<4xf32>
      %18 = vector.multi_reduction <add>, %16, %cst_17 [0] : vector<2x4xf32> to vector<4xf32>
      %19 = vector.shape_cast %18 : vector<4xf32> to vector<1x4xf32>
      %cst_18 = arith.constant 0.001953125 : f32
      %20 = vector.broadcast %cst_18 : f32 to vector<1x4xf32>
      %21 = arith.mulf %19, %20 : vector<1x4xf32>
      %cst_19 = arith.constant dense<0.000000e+00> : vector<4xf32>
      %22 = vector.multi_reduction <add>, %17, %cst_19 [0] : vector<2x4xf32> to vector<4xf32>
      %23 = vector.shape_cast %22 : vector<4xf32> to vector<1x4xf32>
      %cst_20 = arith.constant 0.001953125 : f32
      %24 = vector.broadcast %cst_20 : f32 to vector<1x4xf32>
      %25 = arith.mulf %23, %24 : vector<1x4xf32>
      %26 = arith.mulf %21, %21 : vector<1x4xf32>
      %27 = arith.subf %25, %26 : vector<1x4xf32>
      %cst_21 = arith.constant 0.000000e+00 : f32
      %28 = vector.broadcast %cst_21 : f32 to vector<1x4xf32>
      %29 = arith.maximumf %27, %28 : vector<1x4xf32>
      %cst_22 = arith.constant 9.99999974E-6 : f32
      %30 = vector.broadcast %cst_22 : f32 to vector<1x4xf32>
      %31 = arith.addf %29, %30 : vector<1x4xf32>
      %32 = math.rsqrt %31 : vector<1x4xf32>
      %c0_23 = arith.constant 0 : index
      %c0_24 = arith.constant 0 : index
      %33 = vector.load %arg2[%c0_23, %c0_24] : memref<1x4xf32, #tpu.memory_space<vmem>>, vector<1x4xf32>
      %34 = arith.mulf %33, %32 : vector<1x4xf32>
      %c0_25 = arith.constant 0 : index
      %c0_26 = arith.constant 0 : index
      %35 = vector.load %arg3[%c0_25, %c0_26] : memref<1x4xf32, #tpu.memory_space<vmem>>, vector<1x4xf32>
      %36 = arith.mulf %21, %34 : vector<1x4xf32>
      %37 = arith.subf %35, %36 : vector<1x4xf32>
      %cst_27 = arith.constant 3.906250e-03 : f32
      %38 = vector.broadcast %cst_27 : f32 to vector<2x4xf32>
      %39 = arith.mulf %16, %38 : vector<2x4xf32>
      %40 = vector.broadcast %34 : vector<1x4xf32> to vector<2x4xf32>
      %41 = arith.mulf %39, %40 : vector<2x4xf32>
      %42 = vector.broadcast %37 : vector<1x4xf32> to vector<2x4xf32>
      %43 = arith.addf %41, %42 : vector<2x4xf32>
      %c0_28 = arith.constant 0 : index
      %c0_29 = arith.constant 0 : index
      %44 = vector.load %arg4[%c0_28, %c0_29] : memref<4x4xf32, #tpu.memory_space<vmem>>, vector<4x4xf32>
      %cst_30 = arith.constant dense<0.000000e+00> : vector<2x4xf32>
      %45 = tpu.matmul %43, %44, %cst_30 {dimension_numbers = #tpu.dot_dimension_numbers<[1], [0], [0], [1], [0, 0, 1, 1], [], []>} : vector<2x4xf32>, vector<4x4xf32>, vector<2x4xf32> -> vector<2x4xf32>
      %c0_31 = arith.constant 0 : index
      %c0_32 = arith.constant 0 : index
      %46 = vector.load %arg5[%c0_31, %c0_32] : memref<1x4xf32, #tpu.memory_space<vmem>>, vector<1x4xf32>
      %47 = vector.broadcast %46 : vector<1x4xf32> to vector<2x4xf32>
      %48 = arith.addf %45, %47 : vector<2x4xf32>
      %49 = arith.negf %48 : vector<2x4xf32>
      %50 = math.exp %49 : vector<2x4xf32>
      %cst_33 = arith.constant 1.000000e+00 : f32
      %51 = vector.broadcast %cst_33 : f32 to vector<2x4xf32>
      %52 = arith.addf %51, %50 : vector<2x4xf32>
      %53 = arith.divf %51, %52 : vector<2x4xf32>
      %54 = vector.broadcast %34 : vector<1x4xf32> to vector<2x4xf32>
      %55 = arith.mulf %54, %53 : vector<2x4xf32>
      %c0_34 = arith.constant 0 : index
      %c0_35 = arith.constant 0 : index
      %56 = vector.load %arg6[%c0_34, %c0_35] : memref<2x4xf32, #tpu.memory_space<vmem>>, vector<2x4xf32>
      tpu.vector_store %arg6[%c0_34, %c0_35], %55 {strides = array<i32>} : memref<2x4xf32, #tpu.memory_space<vmem>>, vector<2x4xf32>,
      %57 = vector.broadcast %37 : vector<1x4xf32> to vector<2x4xf32>
      %58 = arith.mulf %57, %53 : vector<2x4xf32>
      %c0_36 = arith.constant 0 : index
      %c0_37 = arith.constant 0 : index
      %59 = vector.load %arg7[%c0_36, %c0_37] : memref<2x4xf32, #tpu.memory_space<vmem>>, vector<2x4xf32>
      tpu.vector_store %arg7[%c0_36, %c0_37], %58 {strides = array<i32>} : memref<2x4xf32, #tpu.memory_space<vmem>>, vector<2x4xf32>,
    } else {
    }
    return
  }
  func.func @transform_0(%arg0: i32) -> (i32, i32, i32) {
    %c0_i32 = arith.constant 0 : i32
    %c0_i32_0 = arith.constant 0 : i32
    %c0_i32_1 = arith.constant 0 : i32
    return %c0_i32, %c0_i32_0, %arg0 : i32, i32, i32
  }
  func.func @transform_1(%arg0: i32) -> (i32, i32) {
    %c0_i32 = arith.constant 0 : i32
    %c0_i32_0 = arith.constant 0 : i32
    %c0_i32_1 = arith.constant 0 : i32
    return %c0_i32, %c0_i32_0 : i32, i32
  }
  func.func @transform_2(%arg0: i32) -> (i32, i32) {
    %c0_i32 = arith.constant 0 : i32
    %c0_i32_0 = arith.constant 0 : i32
    %c0_i32_1 = arith.constant 0 : i32
    return %c0_i32, %c0_i32_0 : i32, i32
  }
  func.func @transform_3(%arg0: i32) -> (i32, i32) {
    %c0_i32 = arith.constant 0 : i32
    %c0_i32_0 = arith.constant 0 : i32
    %c0_i32_1 = arith.constant 0 : i32
    return %c0_i32, %c0_i32_0 : i32, i32
  }
  func.func @transform_4(%arg0: i32) -> (i32, i32) {
    %c0_i32 = arith.constant 0 : i32
    %c0_i32_0 = arith.constant 0 : i32
    %c0_i32_1 = arith.constant 0 : i32
    return %c0_i32, %c0_i32_0 : i32, i32
  }
  func.func @transform_5(%arg0: i32) -> (i32, i32) {
    %c0_i32 = arith.constant 0 : i32
    %c0_i32_0 = arith.constant 0 : i32
    %c0_i32_1 = arith.constant 0 : i32
    return %c0_i32, %c0_i32_0 : i32, i32
  }
  func.func @transform_6(%arg0: i32) -> (i32, i32) {
    %c0_i32 = arith.constant 0 : i32
    %c0_i32_0 = arith.constant 0 : i32
    %c0_i32_1 = arith.constant 0 : i32
    return %c0_i32, %c0_i32_0 : i32, i32
  }
}

</mosaic_0001>

<llo_original>
// kernel: tpu_custom_call.1
$region0: #{tpu_custom_call.1}
  #allocation0 [shape = 'u32[]', space=smem, size = 0x4, offset = 0x4, fixed_abs, tag = 'smem constant byte address 0x4 - core index']
  #allocation1 [shape = 'u32[144,128]{1,0:T(1,128)}', space=vmem, size = 0x12000, scoped, tag = 'internal scratch']
  #allocation2 [shape = 'f32[2,4]{1,0:T(2,128)}', space=vmem, size = 0x400, scoped, tag = 'scratch operand']
  #allocation3 [shape = 'f32[2,4]{1,0:T(2,128)}', space=vmem, size = 0x400, scoped, tag = 'scratch operand']
  %s0 = inlined_call_operand.hbm [shape: f32[2,4,256], index: 0, kind: input, shape index: {}]
  %s1 = inlined_call_operand.vmem [shape: f32[1,4], index: 1, kind: input, shape index: {}]
  %s2 = inlined_call_operand.vmem [shape: f32[1,4], index: 2, kind: input, shape index: {}]
  %s3 = inlined_call_operand.vmem [shape: f32[4,4], index: 3, kind: input, shape index: {}]
  %s4 = inlined_call_operand.vmem [shape: f32[1,4], index: 4, kind: input, shape index: {}]
  %s5 = inlined_call_operand.hbm [shape: f32[2,4], index: 5, kind: output, shape index: {0}]
  %s6 = inlined_call_operand.hbm [shape: f32[2,4], index: 6, kind: output, shape index: {1}]
  %7 = xla_tuple %s5, %s6
  %s8 = sld [smem:[#allocation0]]
  $region73: #{tpu_custom_call.1} parent=0
    _
  %s10 = ssub.s32 1, %s8
  %s11 = scalar_select 0, %s10, %s8
  $region1: #{tpu_custom_call.1} parent=0
    #allocation4 [shape = 'u8[8192]{0}', space=vmem, size = 0x2000, scoped, tag = 'input window, operand 0']
    #allocation5 [shape = 's32[2]{0}', space=sflag, size = 0x8, scoped, tag = 'scoped memory for tpu_custom_call.1']
    #allocation6 [shape = 's32[2]{0}', space=sflag, size = 0x8, scoped, tag = 'scoped memory for tpu_custom_call.1']
    #allocation7 [shape = 'u8[1024]{0}', space=vmem, size = 0x400, scoped, tag = 'output window, operand 0, single buffered']
    #allocation8 [shape = 'u8[1024]{0}', space=vmem, size = 0x400, scoped, tag = 'output window, operand 1, single buffered']
    #allocation9 [shape = 's32[1]{0}', space=sflag, size = 0x4, scoped, tag = 'scoped memory for tpu_custom_call.1']
    %12 = vsyncpa [#allocation5], 0
    %s13 = scalar_lea.sflag [#allocation5], 1
    %14 = vsyncpa %s13, 0
    %15 = vsyncpa [#allocation6], 0
    %16 = vsyncpa [#allocation9], 0
    loop: start=0, step=1, limit=4
    $region2: #{tpu_custom_call.1} parent=1 // loop_pre_header
      _
    $region3: #{tpu_custom_call.1} parent=1 // loop_header
      %s18 = sphi 0, %s22
      %p19 = scmp.ge.s32.totalorder %s18, 4
      %s28 = sphi 0, %s30
      %s31 = sphi 0, %s28
      %s32 = sphi 0, %s31
      %s48 = sphi 0, %s32
      %s52 = sphi 0, %s52
      %s54 = sphi 0, %s52
      %s55 = sphi 0, %s54
      %s69 = sphi 0, %s55
      %s73 = sphi 0, %s73
      %s75 = sphi 0, %s73
      %s76 = sphi 0, %s75
      %s90 = sphi 0, %s76
      %s94 = sphi 0, %s94
      %s96 = sphi 0, %s94
      %s97 = sphi 0, %s96
      %s111 = sphi 0, %s97
      %s115 = sphi 0, %s115
      %s117 = sphi 0, %s115
      %s118 = sphi 0, %s117
      %s132 = sphi 0, %s118
      %s136 = sphi 0, %s136
      %s138 = sphi 0, %s136
      %s139 = sphi 0, %s138
      %s153 = sphi 0, %s139
      %s157 = sphi 0, %s157
      %s159 = sphi 0, %s157
      %s160 = sphi 0, %s159
      %s174 = sphi 0, %s160
    $region4: #{tpu_custom_call.1} parent=1 // loop_header_branch
      %21 = sbr.rel (%p19) target = $region8
    $region5: #{tpu_custom_call.1} parent=1 // loop_body
      %s23 = ssub.s32 %s18, 1
      %s24 = ssub.s32 %s18, 2
      %s25 = sadd.s32 %s18, 1
      %s26 = ssub.s32 %s18, %s25
      %p27 = scmp.eq.s32.totalorder %s26, 0
      %s29 = sadd.s32 %s28, 1
      %s30 = scalar_select %p27, %s28, %s29
      %p33 = pneg %p27
      %p34 = scmp.eq.s32.totalorder %s18, 1
      %p35 = por %p33, %p34
      %p36 = scmp.ne.s32.totalorder %s28, %s31
      %p37 = scmp.eq.s32.totalorder %s18, 0
      %p38 = por %p36, %p37
      %p39 = scmp.ne.s32.totalorder %s28, %s31
      %p40 = scmp.eq.s32.totalorder %s23, 1
      %p41 = por %p39, %p40
      %p42 = scmp.ne.s32.totalorder %s31, %s32
      %p43 = scmp.eq.s32.totalorder %s23, 0
      %p44 = por %p42, %p43
      %p45 = scmp.ne.s32.totalorder %s31, %s32
      %p46 = scmp.eq.s32.totalorder %s24, 1
      %p47 = por %p45, %p46
      %p49 = scmp.ne.s32.totalorder %s32, %s48
      %p50 = scmp.eq.s32.totalorder %s24, 0
      %p51 = por %p49, %p50
      %s53 = sadd.s32 %s52, 1
      %p56 = scmp.eq.s32.totalorder %s18, 1
      %p57 = scmp.ne.s32.totalorder %s52, %s54
      %p58 = scmp.eq.s32.totalorder %s18, 0
      %p59 = por %p57, %p58
      %p60 = scmp.ne.s32.totalorder %s52, %s54
      %p61 = scmp.eq.s32.totalorder %s23, 1
      %p62 = por %p60, %p61
      %p63 = scmp.ne.s32.totalorder %s54, %s55
      %p64 = scmp.eq.s32.totalorder %s23, 0
      %p65 = por %p63, %p64
      %p66 = scmp.ne.s32.totalorder %s54, %s55
      %p67 = scmp.eq.s32.totalorder %s24, 1
      %p68 = por %p66, %p67
      %p70 = scmp.ne.s32.totalorder %s55, %s69
      %p71 = scmp.eq.s32.totalorder %s24, 0
      %p72 = por %p70, %p71
      %s74 = sadd.s32 %s73, 1
      %p77 = scmp.eq.s32.totalorder %s18, 1
      %p78 = scmp.ne.s32.totalorder %s73, %s75
      %p79 = scmp.eq.s32.totalorder %s18, 0
      %p80 = por %p78, %p79
      %p81 = scmp.ne.s32.totalorder %s73, %s75
      %p82 = scmp.eq.s32.totalorder %s23, 1
      %p83 = por %p81, %p82
      %p84 = scmp.ne.s32.totalorder %s75, %s76
      %p85 = scmp.eq.s32.totalorder %s23, 0
      %p86 = por %p84, %p85
      %p87 = scmp.ne.s32.totalorder %s75, %s76
      %p88 = scmp.eq.s32.totalorder %s24, 1
      %p89 = por %p87, %p88
      %p91 = scmp.ne.s32.totalorder %s76, %s90
      %p92 = scmp.eq.s32.totalorder %s24, 0
      %p93 = por %p91, %p92
      %s95 = sadd.s32 %s94, 1
      %p98 = scmp.eq.s32.totalorder %s18, 1
      %p99 = scmp.ne.s32.totalorder %s94, %s96
      %p100 = scmp.eq.s32.totalorder %s18, 0
      %p101 = por %p99, %p100
      %p102 = scmp.ne.s32.totalorder %s94, %s96
      %p103 = scmp.eq.s32.totalorder %s23, 1
      %p104 = por %p102, %p103
      %p105 = scmp.ne.s32.totalorder %s96, %s97
      %p106 = scmp.eq.s32.totalorder %s23, 0
      %p107 = por %p105, %p106
      %p108 = scmp.ne.s32.totalorder %s96, %s97
      %p109 = scmp.eq.s32.totalorder %s24, 1
      %p110 = por %p108, %p109
      %p112 = scmp.ne.s32.totalorder %s97, %s111
      %p113 = scmp.eq.s32.totalorder %s24, 0
      %p114 = por %p112, %p113
      %s116 = sadd.s32 %s115, 1
      %p119 = scmp.eq.s32.totalorder %s18, 1
      %p120 = scmp.ne.s32.totalorder %s115, %s117
      %p121 = scmp.eq.s32.totalorder %s18, 0
      %p122 = por %p120, %p121
      %p123 = scmp.ne.s32.totalorder %s115, %s117
      %p124 = scmp.eq.s32.totalorder %s23, 1
      %p125 = por %p123, %p124
      %p126 = scmp.ne.s32.totalorder %s117, %s118
      %p127 = scmp.eq.s32.totalorder %s23, 0
      %p128 = por %p126, %p127
      %p129 = scmp.ne.s32.totalorder %s117, %s118
      %p130 = scmp.eq.s32.totalorder %s24, 1
      %p131 = por %p129, %p130
      %p133 = scmp.ne.s32.totalorder %s118, %s132
      %p134 = scmp.eq.s32.totalorder %s24, 0
      %p135 = por %p133, %p134
      %s137 = sadd.s32 %s136, 1
      %p140 = scmp.eq.s32.totalorder %s18, 1
      %p141 = scmp.ne.s32.totalorder %s136, %s138
      %p142 = scmp.eq.s32.totalorder %s18, 0
      %p143 = por %p141, %p142
      %p144 = scmp.ne.s32.totalorder %s136, %s138
      %p145 = scmp.eq.s32.totalorder %s23, 1
      %p146 = por %p144, %p145
      %p147 = scmp.ne.s32.totalorder %s138, %s139
      %p148 = scmp.eq.s32.totalorder %s23, 0
      %p149 = por %p147, %p148
      %p150 = scmp.ne.s32.totalorder %s138, %s139
      %p151 = scmp.eq.s32.totalorder %s24, 1
      %p152 = por %p150, %p151
      %p154 = scmp.ne.s32.totalorder %s139, %s153
      %p155 = scmp.eq.s32.totalorder %s24, 0
      %p156 = por %p154, %p155
      %s158 = sadd.s32 %s157, 1
      %p161 = scmp.eq.s32.totalorder %s18, 1
      %p162 = scmp.ne.s32.totalorder %s157, %s159
      %p163 = scmp.eq.s32.totalorder %s18, 0
      %p164 = por %p162, %p163
      %p165 = scmp.ne.s32.totalorder %s157, %s159
      %p166 = scmp.eq.s32.totalorder %s23, 1
      %p167 = por %p165, %p166
      %p168 = scmp.ne.s32.totalorder %s159, %s160
      %p169 = scmp.eq.s32.totalorder %s23, 0
      %p170 = por %p168, %p169
      %p171 = scmp.ne.s32.totalorder %s159, %s160
      %p172 = scmp.eq.s32.totalorder %s24, 1
      %p173 = por %p171, %p172
      %p175 = scmp.ne.s32.totalorder %s160, %s174
      %p176 = scmp.eq.s32.totalorder %s24, 0
      %p177 = por %p175, %p176
      %p178 = scmp.le.s32.totalorder 1, %s18
      %p179 = scmp.lt.s32.totalorder %s18, 3
      %p180 = pnand %p178, %p179
      %p181 = pneg %p180
      // Predicated region
      $region9: #{tpu_custom_call.1} parent=5 // pred_check
        _
      $region10: #{tpu_custom_call.1} parent=5 // pred_check_branch
        %183 = sbr.rel (%p180) target = $region12
      $region11: #{tpu_custom_call.1} parent=5 // pred_region
        %s184 = ssub.s32 %s18, 1
        // Predicated region
        $region13: #{tpu_custom_call.1} parent=11 // pred_check
          %p185 = pneg %p65
        $region14: #{tpu_custom_call.1} parent=11 // pred_check_branch
          %187 = sbr.rel (%p185) target = $region16
        $region15: #{tpu_custom_call.1} parent=11 // pred_region
          _
        $region16: #{tpu_custom_call.1} parent=11 // pred_fallthru
          _
        // Predicated region
        $region17: #{tpu_custom_call.1} parent=11 // pred_check
          %p188 = pneg %p86
        $region18: #{tpu_custom_call.1} parent=11 // pred_check_branch
          %190 = sbr.rel (%p188) target = $region20
        $region19: #{tpu_custom_call.1} parent=11 // pred_region
          _
        $region20: #{tpu_custom_call.1} parent=11 // pred_fallthru
          _
        // Predicated region
        $region21: #{tpu_custom_call.1} parent=11 // pred_check
          %p191 = pneg %p107
        $region22: #{tpu_custom_call.1} parent=11 // pred_check_branch
          %193 = sbr.rel (%p191) target = $region24
        $region23: #{tpu_custom_call.1} parent=11 // pred_region
          _
        $region24: #{tpu_custom_call.1} parent=11 // pred_fallthru
          _
        // Predicated region
        $region25: #{tpu_custom_call.1} parent=11 // pred_check
          %p194 = pneg %p128
        $region26: #{tpu_custom_call.1} parent=11 // pred_check_branch
          %196 = sbr.rel (%p194) target = $region28
        $region27: #{tpu_custom_call.1} parent=11 // pred_region
          _
        $region28: #{tpu_custom_call.1} parent=11 // pred_fallthru
          _
      $region12: #{tpu_custom_call.1} parent=5 // pred_fallthru
        _
      %p197 = scmp.lt.s32.totalorder %s18, 2
      // Predicated region
      $region29: #{tpu_custom_call.1} parent=5 // pred_check
        %p198 = pneg %p197
      $region30: #{tpu_custom_call.1} parent=5 // pred_check_branch
        %200 = sbr.rel (%p198) target = $region32
      $region31: #{tpu_custom_call.1} parent=5 // pred_region
        // Predicated region
        $region33: #{tpu_custom_call.1} parent=31 // pred_check
          %p201 = pneg %p38
        $region34: #{tpu_custom_call.1} parent=31 // pred_check_branch
          %203 = sbr.rel (%p201) target = $region36
        $region35: #{tpu_custom_call.1} parent=31 // pred_region
          %s204 = sand.u32 %s28, 1
          %s205 = scalar_lea.sflag [#allocation5], %s204
          %s206 = sand.u32 %s28, 1
          %s207 = smul.addr %s206, 8
          %s208 = scalar_lea.vmem [#allocation4], %s207
          %s210 = ssub.s32 128, 128
          %211 = vsyncadd %s205, %s210
          %s212 = smul.addr %s18, 64
          %s213 = scalar_lea.hbm %s0, %s212
          %s214 = sshll.u32 %s208, 4
          %s215 = int_to_ptr.vmem [resolvable:$true] %s214
          %220 = dma.hbm_to_vmem [thread:$0]  %s213, 128, %s215, %s205, 128, 64, 4
        $region36: #{tpu_custom_call.1} parent=31 // pred_fallthru
          _
      $region32: #{tpu_custom_call.1} parent=5 // pred_fallthru
        _
      %p221 = scmp.le.s32.totalorder 1, %s18
      %p222 = scmp.lt.s32.totalorder %s18, 3
      %p223 = pnand %p221, %p222
      %p224 = pneg %p223
      // Predicated region
      $region37: #{tpu_custom_call.1} parent=5 // pred_check
        _
      $region38: #{tpu_custom_call.1} parent=5 // pred_check_branch
        %226 = sbr.rel (%p223) target = $region40
      $region39: #{tpu_custom_call.1} parent=5 // pred_region
        %s227 = ssub.s32 %s18, 1
        %s228 = sand.u32 %s31, 1
        %s229 = scalar_lea.sflag [#allocation5], %s228
        %s230 = sand.u32 %s31, 1
        %s231 = smul.addr %s230, 8
        %s232 = scalar_lea.vmem [#allocation4], %s231
        // Predicated region
        $region41: #{tpu_custom_call.1} parent=39 // pred_check
          %p233 = pneg %p44
        $region42: #{tpu_custom_call.1} parent=39 // pred_check_branch
          %235 = sbr.rel (%p233) target = $region44
        $region43: #{tpu_custom_call.1} parent=39 // pred_region
          %236 = dma.done %s229, 128
        $region44: #{tpu_custom_call.1} parent=39 // pred_fallthru
          _
        %s237 = sand.u32 %s31, 1
        %s238 = scalar_lea.sflag [#allocation5], %s237
        %s239 = sand.u32 %s31, 1
        %s240 = smul.addr %s239, 8
        %s241 = scalar_lea.vmem [#allocation4], %s240
        %p242 = pneg %p44
        %p243 = pneg %p41
        %p244 = pneg %p65
        %p245 = pneg %p62
        %p246 = pneg %p86
        %p247 = pneg %p83
        %p248 = pneg %p107
        %p249 = pneg %p104
        %p250 = pneg %p128
        %p251 = pneg %p125
        %p252 = pneg %p149
        %p253 = pneg %p146
        %p254 = pneg %p170
        %p255 = pneg %p167
        %p256 = scmp.eq.s32.totalorder %s23, 0
        // Predicated region
        $region45: #{tpu_custom_call.1} parent=39 // pred_check
          %p257 = pneg %p256
        $region46: #{tpu_custom_call.1} parent=39 // pred_check_branch
          %259 = sbr.rel (%p257) target = $region48
        $region47: #{tpu_custom_call.1} parent=39 // pred_region
          %vm260 = vcmask 25600
          %261 = vst.msk [vmem:[#allocation2] sm:$0x3] %vm260, 0.0
          %262 = vst.msk [vmem:[#allocation3] sm:$0x3] %vm260, 0.0
        $region48: #{tpu_custom_call.1} parent=39 // pred_fallthru
          _
        %v263 = vld [vmem:[%s232] sm:$0xf]
        %v264 = vld [vmem:[%s232 + $0x4] sm:$0xf]
        %v265 = vld [vmem:[#allocation2] sm:$0x3]
        %vm266 = vcmask 1043456
        %v267 = vsel %vm266, %v263, 0.0
        %268 = vadd.xlane.f32.xlu0 %v267
        %v269 = vpop.xlane.xlu0 %268
        %v270 = vsel %vm266, %v264, 0.0
        %271 = vadd.xlane.f32.xlu0 %v270
        %v272 = vpop.xlane.xlu0 %271
        %v275 = vlaneseq
        %v276 = vand.u32 %v275, 127
        %v277 = vlaneseq
        %v278 = vshrl.u32 %v277, 7
        %v279 = vsub.s32 %v276, %v278
        %v280 = vrot.slane %v269, %v279
        %v281 = vlaneseq
        %v282 = vshrl.u32 %v281, 7
        %v283 = vsub.s32 %v276, %v282
        %v284 = vrot.slane %v272, %v283
        %vm285 = vcmask 1041409
        %v286 = vsel %vm285, %v284, %v280
        %v288 = vadd.f32 %v265, %v286
        %vm289 = vcmask 25600
        %290 = vst.msk [vmem:[#allocation2] sm:$0x3] %vm289, %v288
        %v291 = vld [vmem:[#allocation3] sm:$0x3]
        %v292 = vmul.f32 %v263, %v263
        %v293 = vmul.f32 %v264, %v264
        %v294 = vsel %vm266, %v292, 0.0
        %295 = vadd.xlane.f32.xlu0 %v294
        %v296 = vpop.xlane.xlu0 %295
        %v297 = vsel %vm266, %v293, 0.0
        %298 = vadd.xlane.f32.xlu0 %v297
        %v299 = vpop.xlane.xlu0 %298
        %v302 = vlaneseq
        %v303 = vshrl.u32 %v302, 7
        %v304 = vsub.s32 %v276, %v303
        %v305 = vrot.slane %v296, %v304
        %v306 = vlaneseq
        %v307 = vshrl.u32 %v306, 7
        %v308 = vsub.s32 %v276, %v307
        %v309 = vrot.slane %v299, %v308
        %v310 = vsel %vm285, %v309, %v305
        %v312 = vadd.f32 %v291, %v310
        %313 = vst.msk [vmem:[#allocation3] sm:$0x3] %vm289, %v312
        %p314 = scmp.eq.s32.totalorder %s23, 1
        // Predicated region
        $region49: #{tpu_custom_call.1} parent=39 // pred_check
          %p315 = pneg %p314
        $region50: #{tpu_custom_call.1} parent=39 // pred_check_branch
          %317 = sbr.rel (%p315) target = $region52
        $region51: #{tpu_custom_call.1} parent=39 // pred_region
          %v318 = vld [vmem:[#allocation2] sm:$0x3]
          %v319 = vld [vmem:[#allocation3] sm:$0x3]
          %v320 = vsel %vm289, %v318, 0.0
          %v321 = vrot.slane %v320, 4
          %v322 = vadd.f32 %v320, %v321
          %v323 = vrot.slane %v322, 2
          %v324 = vadd.f32 %v322, %v323
          %v325 = vrot.slane %v324, 1
          %v326 = vadd.f32 %v324, %v325
          %v327 = vmul.f32 %v326, 0.001953125
          %v328 = vsel %vm289, %v319, 0.0
          %v329 = vrot.slane %v328, 4
          %v330 = vadd.f32 %v328, %v329
          %v331 = vrot.slane %v330, 2
          %v332 = vadd.f32 %v330, %v331
          %v333 = vrot.slane %v332, 1
          %v334 = vadd.f32 %v332, %v333
          %v335 = vmul.f32 %v334, 0.001953125
          %v336 = vmul.f32 %v327, %v327
          %v337 = vsub.f32 %v335, %v336
          %v338 = vmax.f32 %v337, 0.0
          %v339 = vadd.f32 %v338, 1e-05
          %v340 = vrsqrt.pop %v339
          %v341 = vld [vmem:[%s1] sm:$0x1]
          %v342 = vmul.f32 %v341, %v340
          %v343 = vld [vmem:[%s2] sm:$0x1]
          %v344 = vmul.f32 %v327, %v342
          %v345 = vsub.f32 %v343, %v344
          %v346 = vmul.f32 %v318, 0.00390625
          %v348 = vlaneseq
          %v349 = vshrl.u32 %v348, 7
          %v350 = vsub.s32 0, %v349
          %v351 = vrot.slane %v342, %v350
          %v353 = vmul.f32 %v346, %v351
          %v355 = vlaneseq
          %v356 = vshrl.u32 %v355, 7
          %v357 = vsub.s32 0, %v356
          %v358 = vrot.slane %v345, %v357
          %v360 = vadd.f32 %v353, %v358
          %v361 = vld [vmem:[%s3] sm:$0xf]
          %v362 = vld [vmem:[%s4] sm:$0x1]
          %v364 = vlaneseq
          %v365 = vshrl.u32 %v364, 7
          %v366 = vsub.s32 0, %v365
          %v367 = vrot.slane %v362, %v366
          %vm369 = vcmask 31744
          %v371 = vsel %vm369, %v360, 0
          %v374 = vsel %vm266, %v361, 0
          %376 = vmatprep.subr.mxu0 0.0
          %377 = vmatpush1.msra.mxu0 %v374
          %378 = vmatprep.subr.mxu0 0.0
          %379 = vmatpush1.msra.mxu0 0.0
          %380 = vmatprep.subr.mxu0 0.0
          %381 = vmatpush1.msra.mxu0 0.0
          %382 = vmatprep.subr.mxu0 0.0
          %383 = vmatpush1.msra.mxu0 0.0
          %384 = vmatprep.subr.mxu0 0.0
          %385 = vmatpush1.msra.mxu0 0.0
          %386 = vmatprep.subr.mxu0 0.0
          %387 = vmatpush1.msra.mxu0 0.0
          %388 = vmatprep.subr.mxu0 0.0
          %389 = vmatpush1.msra.mxu0 0.0
          %390 = vmatprep.subr.mxu0 0.0
          %391 = vmatpush1.msra.mxu0 0.0
          %392 = vmatprep.subr.mxu0 0.0
          %393 = vmatpush1.msra.mxu0 0.0
          %394 = vmatprep.subr.mxu0 0.0
          %395 = vmatpush1.msra.mxu0 0.0
          %396 = vmatprep.subr.mxu0 0.0
          %397 = vmatpush1.msra.mxu0 0.0
          %398 = vmatprep.subr.mxu0 0.0
          %399 = vmatpush1.msra.mxu0 0.0
          %400 = vmatprep.subr.mxu0 0.0
          %401 = vmatpush1.msra.mxu0 0.0
          %402 = vmatprep.subr.mxu0 0.0
          %403 = vmatpush1.msra.mxu0 0.0
          %404 = vmatprep.subr.mxu0 0.0
          %405 = vmatpush1.msra.mxu0 0.0
          %406 = vmatprep.subr.mxu0 0.0
          %407 = vmatpush1.msra.mxu0 0.0
          %408 = vmatprep.subr.mxu0 0.0
          %409 = vmatpush1.msra.mxu0 0.0
          %410 = vmatprep.subr.mxu0 0.0
          %411 = vmatpush1.msra.mxu0 0.0
          %412 = vmatprep.subr.mxu0 0.0
          %413 = vmatpush1.msra.mxu0 0.0
          %414 = vmatprep.subr.mxu0 0.0
          %415 = vmatpush1.msra.mxu0 0.0
          %416 = vmatprep.subr.mxu0 0.0
          %417 = vmatpush1.msra.mxu0 0.0
          %418 = vmatprep.subr.mxu0 0.0
          %419 = vmatpush1.msra.mxu0 0.0
          %420 = vmatprep.subr.mxu0 0.0
          %421 = vmatpush1.msra.mxu0 0.0
          %422 = vmatprep.subr.mxu0 0.0
          %423 = vmatpush1.msra.mxu0 0.0
          %424 = vmatprep.subr.mxu0 0.0
          %425 = vmatpush1.msra.mxu0 0.0
          %426 = vmatprep.subr.mxu0 0.0
          %427 = vmatpush1.msra.mxu0 0.0
          %428 = vmatprep.subr.mxu0 0.0
          %429 = vmatpush1.msra.mxu0 0.0
          %430 = vmatprep.subr.mxu0 0.0
          %431 = vmatpush1.msra.mxu0 0.0
          %432 = vmatprep.subr.mxu0 0.0
          %433 = vmatpush1.msra.mxu0 0.0
          %434 = vmatprep.subr.mxu0 0.0
          %435 = vmatpush1.msra.mxu0 0.0
          %436 = vmatprep.subr.mxu0 0.0
          %437 = vmatpush1.msra.mxu0 0.0
          %438 = vmatprep.subr.mxu0 0.0
          %439 = vmatpush1.msra.mxu0 0.0
          %440 = vmatprep.mubr.f32.mxu0 0.0
          %441 = vmatmul.mubr.f32.gmra.mrb[0].mxu0 %v371
          %v442 = vpop.f32.mrb[0].mxu0
          %v443 = vadd.f32 %v367, %v442
          %v444 = vpop.f32.mrb[0].mxu0
          %445 = vdwg.mxu0
          %v446 = vxor.u32 %v443, 2147483648
          %v447 = vmul.f32 %v446, 1.442695
          %v448 = vpow.pop %v447
          %v449 = vadd.f32 %v448, 1.0
          %v450 = vrcp.pop %v449
          %v451 = vmul.f32 1.0, %v450
          %v452 = vmul.f32 %v351, %v451
          %453 = vst.msk [vmem:[#allocation7] sm:$0x3] %vm289, %v452
          %v454 = vmul.f32 %v358, %v451
          %455 = vst.msk [vmem:[#allocation8] sm:$0x3] %vm289, %v454
        $region52: #{tpu_custom_call.1} parent=39 // pred_fallthru
          _
        // Predicated region
        $region53: #{tpu_custom_call.1} parent=39 // pred_check
          %p456 = pneg %p146
        $region54: #{tpu_custom_call.1} parent=39 // pred_check_branch
          %458 = sbr.rel (%p456) target = $region56
        $region55: #{tpu_custom_call.1} parent=39 // pred_region
          %s460 = ssub.s32 32, 32
          %461 = vsyncadd [#allocation6], %s460
          %s463 = sshll.u32 [#allocation7], 4
          %s464 = int_to_ptr.vmem [resolvable:$true] %s463
          %466 = dma.vmem_to_hbm [thread:$0]  %s464, 32, %s5, [#allocation6]
        $region56: #{tpu_custom_call.1} parent=39 // pred_fallthru
          _
        // Predicated region
        $region57: #{tpu_custom_call.1} parent=39 // pred_check
          %p467 = pneg %p167
        $region58: #{tpu_custom_call.1} parent=39 // pred_check_branch
          %469 = sbr.rel (%p467) target = $region60
        $region59: #{tpu_custom_call.1} parent=39 // pred_region
          %s471 = ssub.s32 32, 32
          %472 = vsyncadd [#allocation9], %s471
          %s474 = sshll.u32 [#allocation8], 4
          %s475 = int_to_ptr.vmem [resolvable:$true] %s474
          %477 = dma.vmem_to_hbm [thread:$0]  %s475, 32, %s6, [#allocation9]
        $region60: #{tpu_custom_call.1} parent=39 // pred_fallthru
          _
        // Predicated region
        $region61: #{tpu_custom_call.1} parent=39 // pred_check
          %p478 = pneg %p146
        $region62: #{tpu_custom_call.1} parent=39 // pred_check_branch
          %480 = sbr.rel (%p478) target = $region64
        $region63: #{tpu_custom_call.1} parent=39 // pred_region
          %481 = dma.done [#allocation6], 32
        $region64: #{tpu_custom_call.1} parent=39 // pred_fallthru
          _
        // Predicated region
        $region65: #{tpu_custom_call.1} parent=39 // pred_check
          %p482 = pneg %p167
        $region66: #{tpu_custom_call.1} parent=39 // pred_check_branch
          %484 = sbr.rel (%p482) target = $region68
        $region67: #{tpu_custom_call.1} parent=39 // pred_region
          %485 = dma.done [#allocation9], 32
        $region68: #{tpu_custom_call.1} parent=39 // pred_fallthru
          _
      $region40: #{tpu_custom_call.1} parent=5 // pred_fallthru
        _
      %p486 = scmp.le.s32.totalorder 2, %s18
      // Predicated region
      $region69: #{tpu_custom_call.1} parent=5 // pred_check
        %p487 = pneg %p486
      $region70: #{tpu_custom_call.1} parent=5 // pred_check_branch
        %489 = sbr.rel (%p487) target = $region72
      $region71: #{tpu_custom_call.1} parent=5 // pred_region
        %s490 = ssub.s32 %s18, 2
      $region72: #{tpu_custom_call.1} parent=5 // pred_fallthru
        _
    $region6: #{tpu_custom_call.1} parent=1 // loop_footer
      %s22 = sadd.s32 1, %s18
    $region7: #{tpu_custom_call.1} parent=1 // loop_footer_branch
      %17 = sbr.rel target = $region3
    $region8: #{tpu_custom_call.1} parent=1 // loop_exit
      _
    %491 = vsyncpa [#allocation5], 1
    %s492 = scalar_lea.sflag [#allocation5], 1
    %493 = vsyncpa %s492, 1
    %494 = vsyncpa [#allocation6], 1
    %s495 = scalar_lea.sflag [#allocation6], 1
    %496 = vsyncpa %s495, 1
    %497 = vsyncpa [#allocation9], 1

</llo_original>
